<compile_context>
chip_gen: v5e
topology: v5e:2x2
jax: 0.10.0
libtpu: 0.0.40
codegen_flags: <defaults>
</compile_context>

<pallas_src>
import jax
import jax.numpy as jnp
from jax.experimental import pallas as pl
from jax.experimental.pallas import tpu as pltpu


# ----------------------------------------------------------------------------
# Fused kernel: per batch row  y = x + Wt2^T relu(Wt1^T x + bt1) + bt2   (time)
#                              z = y + relu(y Wc1 + bc1) Wc2 + bc2        (chan)
# All matmuls are plain 2-D MXU dots on the [Lp, Cp] slab (weights are stored
# pre-transposed), so there are no in-kernel transposes or reshapes.
# ----------------------------------------------------------------------------
def _fused_resblock_kernel(x_ref, wt1_ref, bt1_ref, wt2_ref, bt2_ref,
                           wc1_ref, bc1_ref, wc2_ref, bc2_ref, o_ref):
    cd = wt1_ref.dtype                                    # MXU operand dtype
    bb = x_ref.shape[0]
    for i in range(bb):                                   # static unroll, bb <= 4
        x = x_ref[i].astype(jnp.float32)                  # [Lp, Cp]
        # ---- temporal mix (contracts L) ----------------------------------
        h = jnp.dot(wt1_ref[...], x.astype(cd),           # [Dp, Cp]
                    preferred_element_type=jnp.float32)
        h = jnp.maximum(h + bt1_ref[...], 0.0)            # bias + ReLU in f32
        t = jnp.dot(wt2_ref[...], h.astype(cd),           # [Lp, Cp]
                    preferred_element_type=jnp.float32)
        y = x + t + bt2_ref[...]                          # residual #1 (f32)
        # ---- channel mix (contracts C) ------------------------------------
        g = jnp.dot(y.astype(cd), wc1_ref[...],           # [Lp, Dp]
                    preferred_element_type=jnp.float32)
        g = jnp.maximum(g + bc1_ref[...], 0.0)
        z = jnp.dot(g.astype(cd), wc2_ref[...],           # [Lp, Cp]
                    preferred_element_type=jnp.float32)
        o_ref[i] = (y + z + bc2_ref[...]).astype(o_ref.dtype)   # residual #2


# ----------------------------------------------------------------------------
# Helpers
# ----------------------------------------------------------------------------
def _round_up(n, m):
    return ((n + m - 1) // m) * m


def _choose_batch_block(batch, requested):
    """Batch rows per grid step.  Default guarantees >=2 grid steps when B >= 2
    (so v7x megacore can shard the batch axis) while amortizing per-step
    pipeline overhead; always returns a divisor of `batch` (no ragged block)."""
    if requested is not None:
        bb = max(1, min(int(requested), batch))
        while batch % bb:
            bb -= 1
        return bb
    for bb in (4, 2, 1):
        if batch % bb == 0 and batch // bb >= 2:
            return bb
    return 1


_BUFFERED1_SUPPORTED = None


def _buffered1_supported():
    """Explicit capability probe for pl.Buffered(1) single-buffered resident
    weight blocks.  Runs a tiny eager pallas_call once (outside any user jit)
    and caches the answer, so the fallback decision cannot swallow -- or be
    bypassed by -- errors from the real kernel."""
    global _BUFFERED1_SUPPORTED
    if _BUFFERED1_SUPPORTED is None:
        def k(w_ref, o_ref):
            o_ref[...] = w_ref[...] + 1.0
        try:
            f = pl.pallas_call(
                k,
                out_shape=jax.ShapeDtypeStruct((8, 128), jnp.float32),
                grid=(2,),
                in_specs=[pl.BlockSpec((8, 128), lambda i: (0, 0),
                                       pipeline_mode=pl.Buffered(1))],
                out_specs=pl.BlockSpec((8, 128), lambda i: (0, 0)),
            )
            jax.block_until_ready(f(jnp.zeros((8, 128), jnp.float32)))
            _BUFFERED1_SUPPORTED = True
        except Exception:
            _BUFFERED1_SUPPORTED = False
    return _BUFFERED1_SUPPORTED


# ----------------------------------------------------------------------------
# Parameter preparation (transpose / zero-pad / cast ONCE, not per forward)
# ----------------------------------------------------------------------------
def init_params(key, seq_len, enc_in, d_model):
    """Raw (torch-like) params.  Weights are [in, out], biases [1, out]."""
    ks = jax.random.split(key, 8)

    def lin(kw, kb, fan_in, fan_out):
        bound = 1.0 / (fan_in ** 0.5)
        w = jax.random.uniform(kw, (fan_in, fan_out), jnp.float32, -bound, bound)
        b = jax.random.uniform(kb, (1, fan_out), jnp.float32, -bound, bound)
        return w, b

    wt1, bt1 = lin(ks[0], ks[1], seq_len, d_model)   # temporal Linear(seq_len, d_model)
    wt2, bt2 = lin(ks[2], ks[3], d_model, seq_len)   # temporal Linear(d_model, seq_len)
    wc1, bc1 = lin(ks[4], ks[5], enc_in, d_model)    # channel  Linear(enc_in, d_model)
    wc2, bc2 = lin(ks[6], ks[7], d_model, enc_in)    # channel  Linear(d_model, enc_in)
    return dict(wt1=wt1, bt1=bt1, wt2=wt2, bt2=bt2,
                wc1=wc1, bc1=bc1, wc2=wc2, bc2=bc2)


def prepare_params(raw, *, compute_dtype=jnp.float32, lane_multiple=128,
                   sublane_multiple=8):
    """Pad to lane/sublane-friendly sizes, pre-transpose the temporal weights,
    and pre-cast MXU operands (use compute_dtype=jnp.bfloat16 on v6e/v7x; set
    sublane_multiple=16 if you also feed bf16 activations).  Biases stay f32."""
    L, D = raw["wt1"].shape
    C = raw["wc1"].shape[0]
    Lp = _round_up(L, sublane_multiple)
    Cp = _round_up(C, lane_multiple)
    Dp = _round_up(D, lane_multiple)
    cd = compute_dtype

    def pad2(a, shape):
        return jnp.pad(a, ((0, shape[0] - a.shape[0]), (0, shape[1] - a.shape[1])))

    return dict(
        wt1=pad2(raw["wt1"].T, (Dp, Lp)).astype(cd),                    # [Dp, Lp]
        bt1=pad2(raw["bt1"].reshape(-1, 1), (Dp, 1)).astype(jnp.float32),
        wt2=pad2(raw["wt2"].T, (Lp, Dp)).astype(cd),                    # [Lp, Dp]
        bt2=pad2(raw["bt2"].reshape(-1, 1), (Lp, 1)).astype(jnp.float32),
        wc1=pad2(raw["wc1"], (Cp, Dp)).astype(cd),                      # [Cp, Dp]
        bc1=pad2(raw["bc1"].reshape(1, -1), (1, Dp)).astype(jnp.float32),
        wc2=pad2(raw["wc2"], (Dp, Cp)).astype(cd),                      # [Dp, Cp]
        bc2=pad2(raw["bc2"].reshape(1, -1), (1, Cp)).astype(jnp.float32),
        L=L, C=C, D=D, Lp=Lp, Cp=Cp, Dp=Dp,
    )


# ----------------------------------------------------------------------------
# Forward
# ----------------------------------------------------------------------------
def resblock_forward(x, prep, *, batch_block=None):
    """TSMixer ResBlock forward (eval mode).  x: [B, L, C]."""
    B, L, C = x.shape
    assert (L, C) == (prep["L"], prep["C"]), "params prepared for different dims"
    Lp, Cp, Dp = prep["Lp"], prep["Cp"], prep["Dp"]

    padded = (Lp, Cp) != (L, C)
    xp = jnp.pad(x, ((0, 0), (0, Lp - L), (0, Cp - C))) if padded else x

    bb = _choose_batch_block(B, batch_block)
    nb = B // bb

    single = _buffered1_supported()

    def wspec(shape):
        if single:
            return pl.BlockSpec(shape, lambda i: (0, 0), pipeline_mode=pl.Buffered(1))
        return pl.BlockSpec(shape, lambda i: (0, 0))

    weight_keys = ("wt1", "bt1", "wt2", "bt2", "wc1", "bc1", "wc2", "bc2")
    weights = [prep[k] for k in weight_keys]
    wbytes = sum(int(w.size) * w.dtype.itemsize for w in weights)

    # ---- VMEM budget: 2x double-buffered in/out blocks + weights + the f32
    # intermediates (h/g/y/z) that live per unrolled batch row. --------------
    itemsize = x.dtype.itemsize
    blk_bytes = bb * Lp * Cp * itemsize
    interm = bb * (Dp * Cp + Lp * Dp + 2 * Lp * Cp) * 4
    need = 4 * blk_bytes + wbytes * (1 if single else 2) + 2 * interm
    try:
        vmem_cap = int(pltpu.get_tpu_info().vmem_capacity_bytes)
    except Exception:
        vmem_cap = 64 * 1024 * 1024
    vmem_limit = int(min(0.9 * vmem_cap, max(32 * 1024 * 1024, 2 * need)))

    cost = pl.CostEstimate(
        flops=8 * B * Lp * Cp * Dp,
        transcendentals=0,
        bytes_accessed=2 * B * Lp * Cp * itemsize + wbytes,
    )

    out_p = pl.pallas_call(
        _fused_resblock_kernel,
        out_shape=jax.ShapeDtypeStruct((B, Lp, Cp), x.dtype),
        grid_spec=pltpu.PrefetchScalarGridSpec(
            num_scalar_prefetch=0,
            grid=(nb,),
            in_specs=[
                pl.BlockSpec((bb, Lp, Cp), lambda i: (i, 0, 0)),   # x (pipelined)
                wspec((Dp, Lp)),   # wt1^T
                wspec((Dp, 1)),    # bt1 (column)
                wspec((Lp, Dp)),   # wt2^T
                wspec((Lp, 1)),    # bt2 (column)
                wspec((Cp, Dp)),   # wc1
                wspec((1, Dp)),    # bc1 (row)
                wspec((Dp, Cp)),   # wc2
                wspec((1, Cp)),    # bc2 (row)
            ],
            out_specs=pl.BlockSpec((bb, Lp, Cp), lambda i: (i, 0, 0)),
        ),
        compiler_params=pltpu.CompilerParams(
            dimension_semantics=("parallel",),       # batch blocks shard over TCs
            vmem_limit_bytes=vmem_limit,
        ),
        cost_estimate=cost,
    )(xp, *weights)

    return out_p[:, :L, :C] if padded else out_p


# ----------------------------------------------------------------------------
# Pure-JAX reference (matches the PyTorch forward, eval mode)
# ----------------------------------------------------------------------------
def resblock_reference(x, p):
    xt = jnp.swapaxes(x, 1, 2)                                  # [B, C, L]
    t = jnp.maximum(xt @ p["wt1"] + p["bt1"], 0.0) @ p["wt2"] + p["bt2"]
    x = x + jnp.swapaxes(t, 1, 2)
    c = jnp.maximum(x @ p["wc1"] + p["bc1"], 0.0) @ p["wc2"] + p["bc2"]
    return x + c


if __name__ == "__main__":
    # Small shapes consistent with the module: [Batch, Length, Channels]
    B, seq_len, enc_in, d_model = 2, 8, 4, 32

    key = jax.random.PRNGKey(0)
    kx, kp = jax.random.split(key)
    x = jax.random.normal(kx, (B, seq_len, enc_in), jnp.float32)

    raw = init_params(kp, seq_len, enc_in, d_model)
    # f32 MXU operands here so the check vs. the f32 reference stays tight;
    # use compute_dtype=jnp.bfloat16 on v6e/v7x for throughput.
    prep = prepare_params(raw, compute_dtype=jnp.float32)

    out = resblock_forward(x, prep)
    out = jax.block_until_ready(out)

    ref = resblock_reference(x, raw)
    assert out.shape == (B, seq_len, enc_in)
    max_err = float(jnp.max(jnp.abs(out - ref)))
    assert jnp.allclose(out, ref, atol=2e-4, rtol=2e-4), \
        f"mismatch vs reference (max |err| = {max_err})"

    print("KERNEL_OK")
</pallas_src>

<mosaic_0001>
module attributes {stable_mosaic.version = 11 : i64} {
  func.func @k(%arg0: i32, %arg1: memref<8x128xf32, #tpu.memory_space<vmem>>, %arg2: memref<8x128xf32, #tpu.memory_space<vmem>>) attributes {dimension_semantics = [#tpu.dimension_semantics<arbitrary>], iteration_bounds = array<i64: 2>, scalar_prefetch = 0 : i64, scratch_operands = 0 : i64, tpu.core_type = #tpu.core_type<tc>, window_params = [{pipeline_mode = #tpu.pipeline_mode<synchronous>, transform_indices = @transform_0, window_bounds = array<i64: 8, 128>}, {pipeline_mode = #tpu.pipeline_mode<synchronous>, transform_indices = @transform_1, window_bounds = array<i64: 8, 128>}]} {
    %c0 = arith.constant 0 : index
    %c0_0 = arith.constant 0 : index
    %0 = vector.load %arg1[%c0, %c0_0] : memref<8x128xf32, #tpu.memory_space<vmem>>, vector<8x128xf32>
    %cst = arith.constant 1.000000e+00 : f32
    %1 = vector.broadcast %cst : f32 to vector<8x128xf32>
    %2 = arith.addf %0, %1 : vector<8x128xf32>
    %c0_1 = arith.constant 0 : index
    %c0_2 = arith.constant 0 : index
    %3 = vector.load %arg2[%c0_1, %c0_2] : memref<8x128xf32, #tpu.memory_space<vmem>>, vector<8x128xf32>
    tpu.vector_store %arg2[%c0_1, %c0_2], %2 {strides = array<i32>} : memref<8x128xf32, #tpu.memory_space<vmem>>, vector<8x128xf32>,
    return
  }
  func.func @transform_0(%arg0: i32) -> (i32, i32) {
    %c0_i32 = arith.constant 0 : i32
    %c0_i32_0 = arith.constant 0 : i32
    %c0_i32_1 = arith.constant 0 : i32
    return %c0_i32, %c0_i32_0 : i32, i32
  }
  func.func @transform_1(%arg0: i32) -> (i32, i32) {
    %c0_i32 = arith.constant 0 : i32
    %c0_i32_0 = arith.constant 0 : i32
    %c0_i32_1 = arith.constant 0 : i32
    return %c0_i32, %c0_i32_0 : i32, i32
  }
}

module attributes {stable_mosaic.version = 11 : i64} {
  func.func @_fused_resblock_kernel(%arg0: i32, %arg1: memref<1x8x128xf32, #tpu.memory_space<vmem>>, %arg2: memref<128x8xf32, #tpu.memory_space<vmem>>, %arg3: memref<128x1xf32, #tpu.memory_space<vmem>>, %arg4: memref<8x128xf32, #tpu.memory_space<vmem>>, %arg5: memref<8x1xf32, #tpu.memory_space<vmem>>, %arg6: memref<128x128xf32, #tpu.memory_space<vmem>>, %arg7: memref<1x128xf32, #tpu.memory_space<vmem>>, %arg8: memref<128x128xf32, #tpu.memory_space<vmem>>, %arg9: memref<1x128xf32, #tpu.memory_space<vmem>>, %arg10: memref<1x8x128xf32, #tpu.memory_space<vmem>>) attributes {dimension_semantics = [#tpu.dimension_semantics<parallel>], iteration_bounds = array<i64: 2>, scalar_prefetch = 0 : i64, scratch_operands = 0 : i64, tpu.core_type = #tpu.core_type<tc>, window_params = [{transform_indices = @transform_0, window_bounds = array<i64: 1, 8, 128>}, {pipeline_mode = #tpu.pipeline_mode<synchronous>, transform_indices = @transform_1, window_bounds = array<i64: 128, 8>}, {pipeline_mode = #tpu.pipeline_mode<synchronous>, transform_indices = @transform_2, window_bounds = array<i64: 128, 1>}, {pipeline_mode = #tpu.pipeline_mode<synchronous>, transform_indices = @transform_3, window_bounds = array<i64: 8, 128>}, {pipeline_mode = #tpu.pipeline_mode<synchronous>, transform_indices = @transform_4, window_bounds = array<i64: 8, 1>}, {pipeline_mode = #tpu.pipeline_mode<synchronous>, transform_indices = @transform_5, window_bounds = array<i64: 128, 128>}, {pipeline_mode = #tpu.pipeline_mode<synchronous>, transform_indices = @transform_6, window_bounds = array<i64: 1, 128>}, {pipeline_mode = #tpu.pipeline_mode<synchronous>, transform_indices = @transform_7, window_bounds = array<i64: 128, 128>}, {pipeline_mode = #tpu.pipeline_mode<synchronous>, transform_indices = @transform_8, window_bounds = array<i64: 1, 128>}, {transform_indices = @transform_9, window_bounds = array<i64: 1, 8, 128>}]} {
    %c0 = arith.constant 0 : index
    %c0_0 = arith.constant 0 : index
    %c0_1 = arith.constant 0 : index
    %0 = vector.load %arg1[%c0, %c0_0, %c0_1] : memref<1x8x128xf32, #tpu.memory_space<vmem>>, vector<1x8x128xf32>
    %1 = vector.shape_cast %0 : vector<1x8x128xf32> to vector<8x128xf32>
    %c0_2 = arith.constant 0 : index
    %c0_3 = arith.constant 0 : index
    %2 = vector.load %arg2[%c0_2, %c0_3] : memref<128x8xf32, #tpu.memory_space<vmem>>, vector<128x8xf32>
    %cst = arith.constant dense<0.000000e+00> : vector<128x128xf32>
    %3 = tpu.matmul %2, %1, %cst {dimension_numbers = #tpu.dot_dimension_numbers<[1], [0], [0], [1], [0, 0, 1, 1], [], []>} : vector<128x8xf32>, vector<8x128xf32>, vector<128x128xf32> -> vector<128x128xf32>
    %c0_4 = arith.constant 0 : index
    %c0_5 = arith.constant 0 : index
    %4 = vector.load %arg3[%c0_4, %c0_5] : memref<128x1xf32, #tpu.memory_space<vmem>>, vector<128x1xf32>
    %5 = vector.broadcast %4 : vector<128x1xf32> to vector<128x128xf32>
    %6 = arith.addf %3, %5 : vector<128x128xf32>
    %cst_6 = arith.constant 0.000000e+00 : f32
    %7 = vector.broadcast %cst_6 : f32 to vector<128x128xf32>
    %8 = arith.maximumf %6, %7 : vector<128x128xf32>
    %c0_7 = arith.constant 0 : index
    %c0_8 = arith.constant 0 : index
    %9 = vector.load %arg4[%c0_7, %c0_8] : memref<8x128xf32, #tpu.memory_space<vmem>>, vector<8x128xf32>
    %cst_9 = arith.constant dense<0.000000e+00> : vector<8x128xf32>
    %10 = tpu.matmul %9, %8, %cst_9 {dimension_numbers = #tpu.dot_dimension_numbers<[1], [0], [0], [1], [0, 0, 1, 1], [], []>} : vector<8x128xf32>, vector<128x128xf32>, vector<8x128xf32> -> vector<8x128xf32>
    %11 = arith.addf %1, %10 : vector<8x128xf32>
    %c0_10 = arith.constant 0 : index
    %c0_11 = arith.constant 0 : index
    %12 = vector.load %arg5[%c0_10, %c0_11] : memref<8x1xf32, #tpu.memory_space<vmem>>, vector<8x1xf32>
    %13 = vector.broadcast %12 : vector<8x1xf32> to vector<8x128xf32>
    %14 = arith.addf %11, %13 : vector<8x128xf32>
    %c0_12 = arith.constant 0 : index
    %c0_13 = arith.constant 0 : index
    %15 = vector.load %arg6[%c0_12, %c0_13] : memref<128x128xf32, #tpu.memory_space<vmem>>, vector<128x128xf32>
    %cst_14 = arith.constant dense<0.000000e+00> : vector<8x128xf32>
    %16 = tpu.matmul %14, %15, %cst_14 {dimension_numbers = #tpu.dot_dimension_numbers<[1], [0], [0], [1], [0, 0, 1, 1], [], []>} : vector<8x128xf32>, vector<128x128xf32>, vector<8x128xf32> -> vector<8x128xf32>
    %c0_15 = arith.constant 0 : index
    %c0_16 = arith.constant 0 : index
    %17 = vector.load %arg7[%c0_15, %c0_16] : memref<1x128xf32, #tpu.memory_space<vmem>>, vector<1x128xf32>
    %18 = vector.broadcast %17 : vector<1x128xf32> to vector<8x128xf32>
    %19 = arith.addf %16, %18 : vector<8x128xf32>
    %cst_17 = arith.constant 0.000000e+00 : f32
    %20 = vector.broadcast %cst_17 : f32 to vector<8x128xf32>
    %21 = arith.maximumf %19, %20 : vector<8x128xf32>
    %c0_18 = arith.constant 0 : index
    %c0_19 = arith.constant 0 : index
    %22 = vector.load %arg8[%c0_18, %c0_19] : memref<128x128xf32, #tpu.memory_space<vmem>>, vector<128x128xf32>
    %cst_20 = arith.constant dense<0.000000e+00> : vector<8x128xf32>
    %23 = tpu.matmul %21, %22, %cst_20 {dimension_numbers = #tpu.dot_dimension_numbers<[1], [0], [0], [1], [0, 0, 1, 1], [], []>} : vector<8x128xf32>, vector<128x128xf32>, vector<8x128xf32> -> vector<8x128xf32>
    %24 = arith.addf %14, %23 : vector<8x128xf32>
    %c0_21 = arith.constant 0 : index
    %c0_22 = arith.constant 0 : index
    %25 = vector.load %arg9[%c0_21, %c0_22] : memref<1x128xf32, #tpu.memory_space<vmem>>, vector<1x128xf32>
    %26 = vector.broadcast %25 : vector<1x128xf32> to vector<8x128xf32>
    %27 = arith.addf %24, %26 : vector<8x128xf32>
    %c0_23 = arith.constant 0 : index
    %c0_24 = arith.constant 0 : index
    %c0_25 = arith.constant 0 : index
    %28 = vector.load %arg10[%c0_23, %c0_24, %c0_25] : memref<1x8x128xf32, #tpu.memory_space<vmem>>, vector<1x8x128xf32>
    %29 = vector.shape_cast %28 : vector<1x8x128xf32> to vector<8x128xf32>
    %30 = vector.shape_cast %27 : vector<8x128xf32> to vector<1x8x128xf32>
    tpu.vector_store %arg10[%c0_23, %c0_24, %c0_25], %30 {strides = array<i32>} : memref<1x8x128xf32, #tpu.memory_space<vmem>>, vector<1x8x128xf32>,
    return
  }
  func.func @transform_0(%arg0: i32) -> (i32, i32, i32) {
    %c0_i32 = arith.constant 0 : i32
    %c0_i32_0 = arith.constant 0 : i32
    %c0_i32_1 = arith.constant 0 : i32
    return %arg0, %c0_i32, %c0_i32_0 : i32, i32, i32
  }
  func.func @transform_1(%arg0: i32) -> (i32, i32) {
    %c0_i32 = arith.constant 0 : i32
    %c0_i32_0 = arith.constant 0 : i32
    %c0_i32_1 = arith.constant 0 : i32
    return %c0_i32, %c0_i32_0 : i32, i32
  }
  func.func @transform_2(%arg0: i32) -> (i32, i32) {
    %c0_i32 = arith.constant 0 : i32
    %c0_i32_0 = arith.constant 0 : i32
    %c0_i32_1 = arith.constant 0 : i32
    return %c0_i32, %c0_i32_0 : i32, i32
  }
  func.func @transform_3(%arg0: i32) -> (i32, i32) {
    %c0_i32 = arith.constant 0 : i32
    %c0_i32_0 = arith.constant 0 : i32
    %c0_i32_1 = arith.constant 0 : i32
    return %c0_i32, %c0_i32_0 : i32, i32
  }
  func.func @transform_4(%arg0: i32) -> (i32, i32) {
    %c0_i32 = arith.constant 0 : i32
    %c0_i32_0 = arith.constant 0 : i32
    %c0_i32_1 = arith.constant 0 : i32
    return %c0_i32, %c0_i32_0 : i32, i32
  }
  func.func @transform_5(%arg0: i32) -> (i32, i32) {
    %c0_i32 = arith.constant 0 : i32
    %c0_i32_0 = arith.constant 0 : i32
    %c0_i32_1 = arith.constant 0 : i32
    return %c0_i32, %c0_i32_0 : i32, i32
  }
  func.func @transform_6(%arg0: i32) -> (i32, i32) {
    %c0_i32 = arith.constant 0 : i32
    %c0_i32_0 = arith.constant 0 : i32
    %c0_i32_1 = arith.constant 0 : i32
    return %c0_i32, %c0_i32_0 : i32, i32
  }
  func.func @transform_7(%arg0: i32) -> (i32, i32) {
    %c0_i32 = arith.constant 0 : i32
    %c0_i32_0 = arith.constant 0 : i32
    %c0_i32_1 = arith.constant 0 : i32
    return %c0_i32, %c0_i32_0 : i32, i32
  }
  func.func @transform_8(%arg0: i32) -> (i32, i32) {
    %c0_i32 = arith.constant 0 : i32
    %c0_i32_0 = arith.constant 0 : i32
    %c0_i32_1 = arith.constant 0 : i32
    return %c0_i32, %c0_i32_0 : i32, i32
  }
  func.func @transform_9(%arg0: i32) -> (i32, i32, i32) {
    %c0_i32 = arith.constant 0 : i32
    %c0_i32_0 = arith.constant 0 : i32
    %c0_i32_1 = arith.constant 0 : i32
    return %arg0, %c0_i32, %c0_i32_0 : i32, i32, i32
  }
}

</mosaic_0001>

<llo_original>
// kernel: tpu_custom_call.1
$region0: #{tpu_custom_call.1}
  #allocation0 [shape = 'u32[]', space=smem, size = 0x4, offset = 0x4, fixed_abs, tag = 'smem constant byte address 0x4 - core index']
  #allocation1 [shape = 'u32[72,128]{1,0:T(1,128)}', space=vmem, size = 0x9000, scoped, tag = 'internal scratch']
  %s0 = inlined_call_operand.hbm [shape: f32[8,128], index: 0, kind: input, shape index: {}]
  %s1 = inlined_call_operand.hbm [shape: f32[8,128], index: 1, kind: output, shape index: {}]
  %s2 = sld [smem:[#allocation0]]
  $region41: #{tpu_custom_call.1} parent=0
    _
  %s4 = ssub.s32 1, %s2
  %s5 = scalar_select 0, %s4, %s2
  $region1: #{tpu_custom_call.1} parent=0
    #allocation2 [shape = 'u8[4096]{0}', space=vmem, size = 0x1000, scoped, tag = 'input window, operand 0, single buffered']
    #allocation3 [shape = 's32[2]{0}', space=sflag, size = 0x8, scoped, tag = 'scoped memory for tpu_custom_call.1']
    #allocation4 [shape = 's32[2]{0}', space=sflag, size = 0x8, scoped, tag = 'scoped memory for tpu_custom_call.1']
    #allocation5 [shape = 'u8[4096]{0}', space=vmem, size = 0x1000, scoped, tag = 'output window, operand 0, single buffered']
    %6 = vsyncpa [#allocation3], 0
    %7 = vsyncpa [#allocation4], 0
    loop: start=0, step=1, limit=4
    $region2: #{tpu_custom_call.1} parent=1 // loop_pre_header
      _
    $region3: #{tpu_custom_call.1} parent=1 // loop_header
      %s9 = sphi 0, %s13
      %p10 = scmp.ge.s32.totalorder %s9, 4
      %s17 = sphi 0, %s17
      %s19 = sphi 0, %s17
      %s20 = sphi 0, %s19
      %s34 = sphi 0, %s20
      %s38 = sphi 0, %s38
      %s40 = sphi 0, %s38
      %s41 = sphi 0, %s40
      %s55 = sphi 0, %s41
    $region4: #{tpu_custom_call.1} parent=1 // loop_header_branch
      %12 = sbr.rel (%p10) target = $region8
    $region5: #{tpu_custom_call.1} parent=1 // loop_body
      %s14 = ssub.s32 %s9, 1
      %s15 = ssub.s32 %s9, 2
      %s16 = sadd.s32 %s9, 1
      %s18 = sadd.s32 %s17, 1
      %p21 = scmp.eq.s32.totalorder %s9, 1
      %p22 = scmp.ne.s32.totalorder %s17, %s19
      %p23 = scmp.eq.s32.totalorder %s9, 0
      %p24 = por %p22, %p23
      %p25 = scmp.ne.s32.totalorder %s17, %s19
      %p26 = scmp.eq.s32.totalorder %s14, 1
      %p27 = por %p25, %p26
      %p28 = scmp.ne.s32.totalorder %s19, %s20
      %p29 = scmp.eq.s32.totalorder %s14, 0
      %p30 = por %p28, %p29
      %p31 = scmp.ne.s32.totalorder %s19, %s20
      %p32 = scmp.eq.s32.totalorder %s15, 1
      %p33 = por %p31, %p32
      %p35 = scmp.ne.s32.totalorder %s20, %s34
      %p36 = scmp.eq.s32.totalorder %s15, 0
      %p37 = por %p35, %p36
      %s39 = sadd.s32 %s38, 1
      %p42 = scmp.eq.s32.totalorder %s9, 1
      %p43 = scmp.ne.s32.totalorder %s38, %s40
      %p44 = scmp.eq.s32.totalorder %s9, 0
      %p45 = por %p43, %p44
      %p46 = scmp.ne.s32.totalorder %s38, %s40
      %p47 = scmp.eq.s32.totalorder %s14, 1
      %p48 = por %p46, %p47
      %p49 = scmp.ne.s32.totalorder %s40, %s41
      %p50 = scmp.eq.s32.totalorder %s14, 0
      %p51 = por %p49, %p50
      %p52 = scmp.ne.s32.totalorder %s40, %s41
      %p53 = scmp.eq.s32.totalorder %s15, 1
      %p54 = por %p52, %p53
      %p56 = scmp.ne.s32.totalorder %s41, %s55
      %p57 = scmp.eq.s32.totalorder %s15, 0
      %p58 = por %p56, %p57
      %p59 = scmp.le.s32.totalorder 1, %s9
      %p60 = scmp.lt.s32.totalorder %s9, 3
      %p61 = pnand %p59, %p60
      %p62 = pneg %p61
      // Predicated region
      $region9: #{tpu_custom_call.1} parent=5 // pred_check
        _
      $region10: #{tpu_custom_call.1} parent=5 // pred_check_branch
        %64 = sbr.rel (%p61) target = $region12
      $region11: #{tpu_custom_call.1} parent=5 // pred_region
        %s65 = ssub.s32 %s9, 1
        // Predicated region
        $region13: #{tpu_custom_call.1} parent=11 // pred_check
          %p66 = pneg %p30
        $region14: #{tpu_custom_call.1} parent=11 // pred_check_branch
          %68 = sbr.rel (%p66) target = $region16
        $region15: #{tpu_custom_call.1} parent=11 // pred_region
          %70 = vsyncadd [#allocation3], 0
          %s72 = sshll.u32 %s0, 4
          %s73 = int_to_ptr.hbm [resolvable:$true] %s72
          %s74 = sshll.u32 [#allocation2], 4
          %s75 = int_to_ptr.vmem [resolvable:$true] %s74
          %77 = dma.hbm_to_vmem [thread:$0]  %s73, 128, %s75, [#allocation3]
        $region16: #{tpu_custom_call.1} parent=11 // pred_fallthru
          _
      $region12: #{tpu_custom_call.1} parent=5 // pred_fallthru
        _
      %p78 = scmp.lt.s32.totalorder %s9, 2
      // Predicated region
      $region17: #{tpu_custom_call.1} parent=5 // pred_check
        %p79 = pneg %p78
      $region18: #{tpu_custom_call.1} parent=5 // pred_check_branch
        %81 = sbr.rel (%p79) target = $region20
      $region19: #{tpu_custom_call.1} parent=5 // pred_region
        _
      $region20: #{tpu_custom_call.1} parent=5 // pred_fallthru
        _
      %p82 = scmp.le.s32.totalorder 1, %s9
      %p83 = scmp.lt.s32.totalorder %s9, 3
      %p84 = pnand %p82, %p83
      %p85 = pneg %p84
      // Predicated region
      $region21: #{tpu_custom_call.1} parent=5 // pred_check
        _
      $region22: #{tpu_custom_call.1} parent=5 // pred_check_branch
        %87 = sbr.rel (%p84) target = $region24
      $region23: #{tpu_custom_call.1} parent=5 // pred_region
        %s88 = ssub.s32 %s9, 1
        // Predicated region
        $region25: #{tpu_custom_call.1} parent=23 // pred_check
          %p89 = pneg %p30
        $region26: #{tpu_custom_call.1} parent=23 // pred_check_branch
          %91 = sbr.rel (%p89) target = $region28
        $region27: #{tpu_custom_call.1} parent=23 // pred_region
          %93 = dma.done [#allocation3], 128
        $region28: #{tpu_custom_call.1} parent=23 // pred_fallthru
          _
        %p94 = pneg %p30
        %p95 = pneg %p27
        %p96 = pneg %p51
        %p97 = pneg %p48
        %v98 = vld [vmem:[#allocation2] sm:$0xff]
        %v99 = vadd.f32 %v98, 1.0
        %100 = vst [vmem:[#allocation5] sm:$0xff] %v99
        // Predicated region
        $region29: #{tpu_custom_call.1} parent=23 // pred_check
          %p101 = pneg %p48
        $region30: #{tpu_custom_call.1} parent=23 // pred_check_branch
          %103 = sbr.rel (%p101) target = $region32
        $region31: #{tpu_custom_call.1} parent=23 // pred_region
          %105 = vsyncadd [#allocation4], 0
          %s107 = sshll.u32 [#allocation5], 4
          %s108 = int_to_ptr.vmem [resolvable:$true] %s107
          %s109 = sshll.u32 %s1, 4
          %s110 = int_to_ptr.hbm [resolvable:$true] %s109
          %112 = dma.vmem_to_hbm [thread:$0]  %s108, 128, %s110, [#allocation4]
        $region32: #{tpu_custom_call.1} parent=23 // pred_fallthru
          _
        // Predicated region
        $region33: #{tpu_custom_call.1} parent=23 // pred_check
          %p113 = pneg %p48
        $region34: #{tpu_custom_call.1} parent=23 // pred_check_branch
          %115 = sbr.rel (%p113) target = $region36
        $region35: #{tpu_custom_call.1} parent=23 // pred_region
          %117 = dma.done [#allocation4], 128
        $region36: #{tpu_custom_call.1} parent=23 // pred_fallthru
          _
      $region24: #{tpu_custom_call.1} parent=5 // pred_fallthru
        _
      %p118 = scmp.le.s32.totalorder 2, %s9
      // Predicated region
      $region37: #{tpu_custom_call.1} parent=5 // pred_check
        %p119 = pneg %p118
      $region38: #{tpu_custom_call.1} parent=5 // pred_check_branch
        %121 = sbr.rel (%p119) target = $region40
      $region39: #{tpu_custom_call.1} parent=5 // pred_region
        %s122 = ssub.s32 %s9, 2
      $region40: #{tpu_custom_call.1} parent=5 // pred_fallthru
        _
    $region6: #{tpu_custom_call.1} parent=1 // loop_footer
      %s13 = sadd.s32 1, %s9
    $region7: #{tpu_custom_call.1} parent=1 // loop_footer_branch
      %8 = sbr.rel target = $region3
    $region8: #{tpu_custom_call.1} parent=1 // loop_exit
      _
    %123 = vsyncpa [#allocation3], 1
    %s124 = scalar_lea.sflag [#allocation3], 1
    %125 = vsyncpa %s124, 1
    %126 = vsyncpa [#allocation4], 1
    %s127 = scalar_lea.sflag [#allocation4], 1
    %128 = vsyncpa %s127, 1

// kernel: tpu_custom_call.1
$region0: #{tpu_custom_call.1}
  #allocation0 [shape = 'u32[]', space=smem, size = 0x4, offset = 0x4, fixed_abs, tag = 'smem constant byte address 0x4 - core index']
  #allocation1 [shape = 'u32[72,128]{1,0:T(1,128)}', space=vmem, size = 0x9000, scoped, tag = 'internal scratch']
  %s0 = inlined_call_operand.vmem [shape: f32[2,8,128], index: 0, kind: input, shape index: {}]
  %s1 = inlined_call_operand.vmem [shape: f32[128,8], index: 1, kind: input, shape index: {}]
  %s2 = inlined_call_operand.vmem [shape: f32[128,1], index: 2, kind: input, shape index: {}]
  %s3 = inlined_call_operand.hbm [shape: f32[8,128], index: 3, kind: input, shape index: {}]
  %s4 = inlined_call_operand.vmem [shape: f32[8,1], index: 4, kind: input, shape index: {}]
  %s5 = inlined_call_operand.vmem [shape: f32[128,128], index: 5, kind: input, shape index: {}]
  %s6 = inlined_call_operand.vmem [shape: f32[1,128], index: 6, kind: input, shape index: {}]
  %s7 = inlined_call_operand.vmem [shape: f32[128,128], index: 7, kind: input, shape index: {}]
  %s8 = inlined_call_operand.vmem [shape: f32[1,128], index: 8, kind: input, shape index: {}]
  %s9 = inlined_call_operand.hbm [shape: f32[2,8,128], index: 9, kind: output, shape index: {}]
  %s10 = sld [smem:[#allocation0]]
  $region73: #{tpu_custom_call.1} parent=0
    _
  %s12 = ssub.s32 1, %s10
  %s13 = scalar_select 0, %s12, %s10
  $region1: #{tpu_custom_call.1} parent=0
    #allocation2 [shape = 'u8[4096]{0}', space=vmem, size = 0x1000, scoped, tag = 'input window, operand 3, single buffered']
    #allocation3 [shape = 's32[2]{0}', space=sflag, size = 0x8, scoped, tag = 'scoped memory for tpu_custom_call.1']
    #allocation4 [shape = 's32[2]{0}', space=sflag, size = 0x8, scoped, tag = 'scoped memory for tpu_custom_call.1']
    #allocation5 [shape = 'u8[8192]{0}', space=vmem, size = 0x2000, scoped, tag = 'output window, operand 0']
    %14 = vsyncpa [#allocation3], 0
    %15 = vsyncpa [#allocation4], 0
    %s16 = scalar_lea.sflag [#allocation4], 1
    %17 = vsyncpa %s16, 0
    loop: start=0, step=1, limit=4
    $region2: #{tpu_custom_call.1} parent=1 // loop_pre_header
      _
    $region3: #{tpu_custom_call.1} parent=1 // loop_header
      %s19 = sphi 0, %s23
      %p20 = scmp.ge.s32.totalorder %s19, 4
      %s29 = sphi 0, %s31
      %s32 = sphi 0, %s29
      %s33 = sphi 0, %s32
      %s49 = sphi 0, %s33
      %s53 = sphi 0, %s53
      %s55 = sphi 0, %s53
      %s56 = sphi 0, %s55
      %s70 = sphi 0, %s56
      %s74 = sphi 0, %s74
      %s76 = sphi 0, %s74
      %s77 = sphi 0, %s76
      %s91 = sphi 0, %s77
      %s95 = sphi 0, %s95
      %s97 = sphi 0, %s95
      %s98 = sphi 0, %s97
      %s112 = sphi 0, %s98
      %s116 = sphi 0, %s116
      %s118 = sphi 0, %s116
      %s119 = sphi 0, %s118
      %s133 = sphi 0, %s119
      %s137 = sphi 0, %s137
      %s139 = sphi 0, %s137
      %s140 = sphi 0, %s139
      %s154 = sphi 0, %s140
      %s158 = sphi 0, %s158
      %s160 = sphi 0, %s158
      %s161 = sphi 0, %s160
      %s175 = sphi 0, %s161
      %s179 = sphi 0, %s179
      %s181 = sphi 0, %s179
      %s182 = sphi 0, %s181
      %s196 = sphi 0, %s182
      %s200 = sphi 0, %s200
      %s202 = sphi 0, %s200
      %s203 = sphi 0, %s202
      %s217 = sphi 0, %s203
      %s223 = sphi 0, %s225
      %s226 = sphi 0, %s223
      %s227 = sphi 0, %s226
      %s243 = sphi 0, %s227
    $region4: #{tpu_custom_call.1} parent=1 // loop_header_branch
      %22 = sbr.rel (%p20) target = $region8
    $region5: #{tpu_custom_call.1} parent=1 // loop_body
      %s24 = ssub.s32 %s19, 1
      %s25 = ssub.s32 %s19, 2
      %s26 = sadd.s32 %s19, 1
      %s27 = ssub.s32 %s19, %s26
      %p28 = scmp.eq.s32.totalorder %s27, 0
      %s30 = sadd.s32 %s29, 1
      %s31 = scalar_select %p28, %s29, %s30
      %p34 = pneg %p28
      %p35 = scmp.eq.s32.totalorder %s19, 1
      %p36 = por %p34, %p35
      %p37 = scmp.ne.s32.totalorder %s29, %s32
      %p38 = scmp.eq.s32.totalorder %s19, 0
      %p39 = por %p37, %p38
      %p40 = scmp.ne.s32.totalorder %s29, %s32
      %p41 = scmp.eq.s32.totalorder %s24, 1
      %p42 = por %p40, %p41
      %p43 = scmp.ne.s32.totalorder %s32, %s33
      %p44 = scmp.eq.s32.totalorder %s24, 0
      %p45 = por %p43, %p44
      %p46 = scmp.ne.s32.totalorder %s32, %s33
      %p47 = scmp.eq.s32.totalorder %s25, 1
      %p48 = por %p46, %p47
      %p50 = scmp.ne.s32.totalorder %s33, %s49
      %p51 = scmp.eq.s32.totalorder %s25, 0
      %p52 = por %p50, %p51
      %s54 = sadd.s32 %s53, 1
      %p57 = scmp.eq.s32.totalorder %s19, 1
      %p58 = scmp.ne.s32.totalorder %s53, %s55
      %p59 = scmp.eq.s32.totalorder %s19, 0
      %p60 = por %p58, %p59
      %p61 = scmp.ne.s32.totalorder %s53, %s55
      %p62 = scmp.eq.s32.totalorder %s24, 1
      %p63 = por %p61, %p62
      %p64 = scmp.ne.s32.totalorder %s55, %s56
      %p65 = scmp.eq.s32.totalorder %s24, 0
      %p66 = por %p64, %p65
      %p67 = scmp.ne.s32.totalorder %s55, %s56
      %p68 = scmp.eq.s32.totalorder %s25, 1
      %p69 = por %p67, %p68
      %p71 = scmp.ne.s32.totalorder %s56, %s70
      %p72 = scmp.eq.s32.totalorder %s25, 0
      %p73 = por %p71, %p72
      %s75 = sadd.s32 %s74, 1
      %p78 = scmp.eq.s32.totalorder %s19, 1
      %p79 = scmp.ne.s32.totalorder %s74, %s76
      %p80 = scmp.eq.s32.totalorder %s19, 0
      %p81 = por %p79, %p80
      %p82 = scmp.ne.s32.totalorder %s74, %s76
      %p83 = scmp.eq.s32.totalorder %s24, 1
      %p84 = por %p82, %p83
      %p85 = scmp.ne.s32.totalorder %s76, %s77
      %p86 = scmp.eq.s32.totalorder %s24, 0
      %p87 = por %p85, %p86
      %p88 = scmp.ne.s32.totalorder %s76, %s77
      %p89 = scmp.eq.s32.totalorder %s25, 1
      %p90 = por %p88, %p89
      %p92 = scmp.ne.s32.totalorder %s77, %s91
      %p93 = scmp.eq.s32.totalorder %s25, 0
      %p94 = por %p92, %p93
      %s96 = sadd.s32 %s95, 1
      %p99 = scmp.eq.s32.totalorder %s19, 1
      %p100 = scmp.ne.s32.totalorder %s95, %s97
      %p101 = scmp.eq.s32.totalorder %s19, 0
      %p102 = por %p100, %p101
      %p103 = scmp.ne.s32.totalorder %s95, %s97
      %p104 = scmp.eq.s32.totalorder %s24, 1
      %p105 = por %p103, %p104
      %p106 = scmp.ne.s32.totalorder %s97, %s98
      %p107 = scmp.eq.s32.totalorder %s24, 0
      %p108 = por %p106, %p107
      %p109 = scmp.ne.s32.totalorder %s97, %s98
      %p110 = scmp.eq.s32.totalorder %s25, 1
      %p111 = por %p109, %p110
      %p113 = scmp.ne.s32.totalorder %s98, %s112
      %p114 = scmp.eq.s32.totalorder %s25, 0
      %p115 = por %p113, %p114
      %s117 = sadd.s32 %s116, 1
      %p120 = scmp.eq.s32.totalorder %s19, 1
      %p121 = scmp.ne.s32.totalorder %s116, %s118
      %p122 = scmp.eq.s32.totalorder %s19, 0
      %p123 = por %p121, %p122
      %p124 = scmp.ne.s32.totalorder %s116, %s118
      %p125 = scmp.eq.s32.totalorder %s24, 1
      %p126 = por %p124, %p125
      %p127 = scmp.ne.s32.totalorder %s118, %s119
      %p128 = scmp.eq.s32.totalorder %s24, 0
      %p129 = por %p127, %p128
      %p130 = scmp.ne.s32.totalorder %s118, %s119
      %p131 = scmp.eq.s32.totalorder %s25, 1
      %p132 = por %p130, %p131
      %p134 = scmp.ne.s32.totalorder %s119, %s133
      %p135 = scmp.eq.s32.totalorder %s25, 0
      %p136 = por %p134, %p135
      %s138 = sadd.s32 %s137, 1
      %p141 = scmp.eq.s32.totalorder %s19, 1
      %p142 = scmp.ne.s32.totalorder %s137, %s139
      %p143 = scmp.eq.s32.totalorder %s19, 0
      %p144 = por %p142, %p143
      %p145 = scmp.ne.s32.totalorder %s137, %s139
      %p146 = scmp.eq.s32.totalorder %s24, 1
      %p147 = por %p145, %p146
      %p148 = scmp.ne.s32.totalorder %s139, %s140
      %p149 = scmp.eq.s32.totalorder %s24, 0
      %p150 = por %p148, %p149
      %p151 = scmp.ne.s32.totalorder %s139, %s140
      %p152 = scmp.eq.s32.totalorder %s25, 1
      %p153 = por %p151, %p152
      %p155 = scmp.ne.s32.totalorder %s140, %s154
      %p156 = scmp.eq.s32.totalorder %s25, 0
      %p157 = por %p155, %p156
      %s159 = sadd.s32 %s158, 1
      %p162 = scmp.eq.s32.totalorder %s19, 1
      %p163 = scmp.ne.s32.totalorder %s158, %s160
      %p164 = scmp.eq.s32.totalorder %s19, 0
      %p165 = por %p163, %p164
      %p166 = scmp.ne.s32.totalorder %s158, %s160
      %p167 = scmp.eq.s32.totalorder %s24, 1
      %p168 = por %p166, %p167
      %p169 = scmp.ne.s32.totalorder %s160, %s161
      %p170 = scmp.eq.s32.totalorder %s24, 0
      %p171 = por %p169, %p170
      %p172 = scmp.ne.s32.totalorder %s160, %s161
      %p173 = scmp.eq.s32.totalorder %s25, 1
      %p174 = por %p172, %p173
      %p176 = scmp.ne.s32.totalorder %s161, %s175
      %p177 = scmp.eq.s32.totalorder %s25, 0
      %p178 = por %p176, %p177
      %s180 = sadd.s32 %s179, 1
      %p183 = scmp.eq.s32.totalorder %s19, 1
      %p184 = scmp.ne.s32.totalorder %s179, %s181
      %p185 = scmp.eq.s32.totalorder %s19, 0
      %p186 = por %p184, %p185
      %p187 = scmp.ne.s32.totalorder %s179, %s181
      %p188 = scmp.eq.s32.totalorder %s24, 1
      %p189 = por %p187, %p188
      %p190 = scmp.ne.s32.totalorder %s181, %s182
      %p191 = scmp.eq.s32.totalorder %s24, 0
      %p192 = por %p190, %p191
      %p193 = scmp.ne.s32.totalorder %s181, %s182
      %p194 = scmp.eq.s32.totalorder %s25, 1
      %p195 = por %p193, %p194
      %p197 = scmp.ne.s32.totalorder %s182, %s196
      %p198 = scmp.eq.s32.totalorder %s25, 0
      %p199 = por %p197, %p198
      %s201 = sadd.s32 %s200, 1
      %p204 = scmp.eq.s32.totalorder %s19, 1
      %p205 = scmp.ne.s32.totalorder %s200, %s202
      %p206 = scmp.eq.s32.totalorder %s19, 0
      %p207 = por %p205, %p206
      %p208 = scmp.ne.s32.totalorder %s200, %s202
      %p209 = scmp.eq.s32.totalorder %s24, 1
      %p210 = por %p208, %p209
      %p211 = scmp.ne.s32.totalorder %s202, %s203
      %p212 = scmp.eq.s32.totalorder %s24, 0
      %p213 = por %p211, %p212
      %p214 = scmp.ne.s32.totalorder %s202, %s203
      %p215 = scmp.eq.s32.totalorder %s25, 1
      %p216 = por %p214, %p215
      %p218 = scmp.ne.s32.totalorder %s203, %s217
      %p219 = scmp.eq.s32.totalorder %s25, 0
      %p220 = por %p218, %p219
      %s221 = ssub.s32 %s19, %s26
      %p222 = scmp.eq.s32.totalorder %s221, 0
      %s224 = sadd.s32 %s223, 1
      %s225 = scalar_select %p222, %s223, %s224
      %p228 = pneg %p222
      %p229 = scmp.eq.s32.totalorder %s19, 1
      %p230 = por %p228, %p229
      %p231 = scmp.ne.s32.totalorder %s223, %s226
      %p232 = scmp.eq.s32.totalorder %s19, 0
      %p233 = por %p231, %p232
      %p234 = scmp.ne.s32.totalorder %s223, %s226
      %p235 = scmp.eq.s32.totalorder %s24, 1
      %p236 = por %p234, %p235
      %p237 = scmp.ne.s32.totalorder %s226, %s227
      %p238 = scmp.eq.s32.totalorder %s24, 0
      %p239 = por %p237, %p238
      %p240 = scmp.ne.s32.totalorder %s226, %s227
      %p241 = scmp.eq.s32.totalorder %s25, 1
      %p242 = por %p240, %p241
      %p244 = scmp.ne.s32.totalorder %s227, %s243
      %p245 = scmp.eq.s32.totalorder %s25, 0
      %p246 = por %p244, %p245
      %p247 = scmp.le.s32.totalorder 1, %s19
      %p248 = scmp.lt.s32.totalorder %s19, 3
      %p249 = pnand %p247, %p248
      %p250 = pneg %p249
      // Predicated region
      $region9: #{tpu_custom_call.1} parent=5 // pred_check
        _
      $region10: #{tpu_custom_call.1} parent=5 // pred_check_branch
        %252 = sbr.rel (%p249) target = $region12
      $region11: #{tpu_custom_call.1} parent=5 // pred_region
        %s253 = ssub.s32 %s19, 1
        // Predicated region
        $region13: #{tpu_custom_call.1} parent=11 // pred_check
          %p254 = pneg %p66
        $region14: #{tpu_custom_call.1} parent=11 // pred_check_branch
          %256 = sbr.rel (%p254) target = $region16
        $region15: #{tpu_custom_call.1} parent=11 // pred_region
          _
        $region16: #{tpu_custom_call.1} parent=11 // pred_fallthru
          _
        // Predicated region
        $region17: #{tpu_custom_call.1} parent=11 // pred_check
          %p257 = pneg %p87
        $region18: #{tpu_custom_call.1} parent=11 // pred_check_branch
          %259 = sbr.rel (%p257) target = $region20
        $region19: #{tpu_custom_call.1} parent=11 // pred_region
          _
        $region20: #{tpu_custom_call.1} parent=11 // pred_fallthru
          _
        // Predicated region
        $region21: #{tpu_custom_call.1} parent=11 // pred_check
          %p260 = pneg %p108
        $region22: #{tpu_custom_call.1} parent=11 // pred_check_branch
          %262 = sbr.rel (%p260) target = $region24
        $region23: #{tpu_custom_call.1} parent=11 // pred_region
          %264 = vsyncadd [#allocation3], 0
          %s266 = sshll.u32 %s3, 4
          %s267 = int_to_ptr.hbm [resolvable:$true] %s266
          %s268 = sshll.u32 [#allocation2], 4
          %s269 = int_to_ptr.vmem [resolvable:$true] %s268
          %271 = dma.hbm_to_vmem [thread:$0]  %s267, 128, %s269, [#allocation3]
        $region24: #{tpu_custom_call.1} parent=11 // pred_fallthru
          _
        // Predicated region
        $region25: #{tpu_custom_call.1} parent=11 // pred_check
          %p272 = pneg %p129
        $region26: #{tpu_custom_call.1} parent=11 // pred_check_branch
          %274 = sbr.rel (%p272) target = $region28
        $region27: #{tpu_custom_call.1} parent=11 // pred_region
          _
        $region28: #{tpu_custom_call.1} parent=11 // pred_fallthru
          _
        // Predicated region
        $region29: #{tpu_custom_call.1} parent=11 // pred_check
          %p275 = pneg %p150
        $region30: #{tpu_custom_call.1} parent=11 // pred_check_branch
          %277 = sbr.rel (%p275) target = $region32
        $region31: #{tpu_custom_call.1} parent=11 // pred_region
          _
        $region32: #{tpu_custom_call.1} parent=11 // pred_fallthru
          _
        // Predicated region
        $region33: #{tpu_custom_call.1} parent=11 // pred_check
          %p278 = pneg %p171
        $region34: #{tpu_custom_call.1} parent=11 // pred_check_branch
          %280 = sbr.rel (%p278) target = $region36
        $region35: #{tpu_custom_call.1} parent=11 // pred_region
          _
        $region36: #{tpu_custom_call.1} parent=11 // pred_fallthru
          _
        // Predicated region
        $region37: #{tpu_custom_call.1} parent=11 // pred_check
          %p281 = pneg %p192
        $region38: #{tpu_custom_call.1} parent=11 // pred_check_branch
          %283 = sbr.rel (%p281) target = $region40
        $region39: #{tpu_custom_call.1} parent=11 // pred_region
          _
        $region40: #{tpu_custom_call.1} parent=11 // pred_fallthru
          _
        // Predicated region
        $region41: #{tpu_custom_call.1} parent=11 // pred_check
          %p284 = pneg %p213
        $region42: #{tpu_custom_call.1} parent=11 // pred_check_branch
          %286 = sbr.rel (%p284) target = $region44
        $region43: #{tpu_custom_call.1} parent=11 // pred_region
          _
        $region44: #{tpu_custom_call.1} parent=11 // pred_fallthru
          _
      $region12: #{tpu_custom_call.1} parent=5 // pred_fallthru
        _
      %p287 = scmp.lt.s32.totalorder %s19, 2
      // Predicated region
      $region45: #{tpu_custom_call.1} parent=5 // pred_check
        %p288 = pneg %p287
      $region46: #{tpu_custom_call.1} parent=5 // pred_check_branch
        %290 = sbr.rel (%p288) target = $region48
      $region47: #{tpu_custom_call.1} parent=5 // pred_region
        // Predicated region
        $region49: #{tpu_custom_call.1} parent=47 // pred_check
          %p291 = pneg %p39
        $region50: #{tpu_custom_call.1} parent=47 // pred_check_branch
          %293 = sbr.rel (%p291) target = $region52
        $region51: #{tpu_custom_call.1} parent=47 // pred_region
          %p294 = scmp.lt.s32.totalorder %s19, 1
          %s295 = scalar_select %p294, %s19, 1
          %s296 = smul.addr %s295, 8
          %s297 = scalar_lea.vmem %s0, %s296
        $region52: #{tpu_custom_call.1} parent=47 // pred_fallthru
          _
      $region48: #{tpu_custom_call.1} parent=5 // pred_fallthru
        _
      %p298 = scmp.le.s32.totalorder 1, %s19
      %p299 = scmp.lt.s32.totalorder %s19, 3
      %p300 = pnand %p298, %p299
      %p301 = pneg %p300
      // Predicated region
      $region53: #{tpu_custom_call.1} parent=5 // pred_check
        _
      $region54: #{tpu_custom_call.1} parent=5 // pred_check_branch
        %303 = sbr.rel (%p300) target = $region56
      $region55: #{tpu_custom_call.1} parent=5 // pred_region
        %s304 = ssub.s32 %s19, 1
        // Predicated region
        $region57: #{tpu_custom_call.1} parent=55 // pred_check
          %p305 = pneg %p108
        $region58: #{tpu_custom_call.1} parent=55 // pred_check_branch
          %307 = sbr.rel (%p305) target = $region60
        $region59: #{tpu_custom_call.1} parent=55 // pred_region
          %309 = dma.done [#allocation3], 128
        $region60: #{tpu_custom_call.1} parent=55 // pred_fallthru
          _
        %p310 = scmp.lt.s32.totalorder %s24, 1
        %s311 = scalar_select %p310, %s24, 1
        %s312 = smul.addr %s311, 8
        %s313 = scalar_lea.vmem %s0, %s312
        %p314 = pneg %p45
        %p315 = pneg %p42
        %p316 = pneg %p66
        %p317 = pneg %p63
        %p318 = pneg %p87
        %p319 = pneg %p84
        %p320 = pneg %p108
        %p321 = pneg %p105
        %p322 = pneg %p129
        %p323 = pneg %p126
        %p324 = pneg %p150
        %p325 = pneg %p147
        %p326 = pneg %p171
        %p327 = pneg %p168
        %p328 = pneg %p192
        %p329 = pneg %p189
        %p330 = pneg %p213
        %p331 = pneg %p210
        %p332 = pneg %p239
        %p333 = pneg %p236
        %s334 = sand.u32 %s226, 1
        %s335 = scalar_lea.sflag [#allocation4], %s334
        %s336 = sand.u32 %s226, 1
        %s337 = smul.addr %s336, 8
        %s338 = scalar_lea.vmem [#allocation5], %s337
        %p339 = scmp.lt.s32.totalorder %s24, 1
        %s340 = scalar_select %p339, %s24, 1
        %s341 = smul.addr %s340, 8
        %s342 = scalar_lea.vmem %s0, %s341
        %v343 = vld [vmem:[%s342] sm:$0xff]
        %v344 = vld [vmem:[%s1] sm:$0xff]
        %v345 = vld [vmem:[%s1 + $0x8] sm:$0xff]
        %v346 = vld [vmem:[%s1 + $0x10] sm:$0xff]
        %v347 = vld [vmem:[%s1 + $0x18] sm:$0xff]
        %v348 = vld [vmem:[%s1 + $0x20] sm:$0xff]
        %v349 = vld [vmem:[%s1 + $0x28] sm:$0xff]
        %v350 = vld [vmem:[%s1 + $0x30] sm:$0xff]
        %v351 = vld [vmem:[%s1 + $0x38] sm:$0xff]
        %v352 = vld [vmem:[%s1 + $0x40] sm:$0xff]
        %v353 = vld [vmem:[%s1 + $0x48] sm:$0xff]
        %v354 = vld [vmem:[%s1 + $0x50] sm:$0xff]
        %v355 = vld [vmem:[%s1 + $0x58] sm:$0xff]
        %v356 = vld [vmem:[%s1 + $0x60] sm:$0xff]
        %v357 = vld [vmem:[%s1 + $0x68] sm:$0xff]
        %v358 = vld [vmem:[%s1 + $0x70] sm:$0xff]
        %v359 = vld [vmem:[%s1 + $0x78] sm:$0xff]
        %v360 = vld [vmem:[%s2] sm:$0xff]
        %v361 = vld [vmem:[%s2 + $0x8] sm:$0xff]
        %v362 = vld [vmem:[%s2 + $0x10] sm:$0xff]
        %v363 = vld [vmem:[%s2 + $0x18] sm:$0xff]
        %v364 = vld [vmem:[%s2 + $0x20] sm:$0xff]
        %v365 = vld [vmem:[%s2 + $0x28] sm:$0xff]
        %v366 = vld [vmem:[%s2 + $0x30] sm:$0xff]
        %v367 = vld [vmem:[%s2 + $0x38] sm:$0xff]
        %v368 = vld [vmem:[%s2 + $0x40] sm:$0xff]
        %v369 = vld [vmem:[%s2 + $0x48] sm:$0xff]
        %v370 = vld [vmem:[%s2 + $0x50] sm:$0xff]
        %v371 = vld [vmem:[%s2 + $0x58] sm:$0xff]
        %v372 = vld [vmem:[%s2 + $0x60] sm:$0xff]
        %v373 = vld [vmem:[%s2 + $0x68] sm:$0xff]
        %v374 = vld [vmem:[%s2 + $0x70] sm:$0xff]
        %v375 = vld [vmem:[%s2 + $0x78] sm:$0xff]
        %377 = vset.pattern.permute.xlu0 0
        %378 = vperm.xlu0 %377, %v360
        %v379 = vpop.permute.xlu0 %378
        %382 = vset.pattern.permute.xlu0 0
        %383 = vperm.xlu0 %382, %v361
        %v384 = vpop.permute.xlu0 %383
        %387 = vset.pattern.permute.xlu0 0
        %388 = vperm.xlu0 %387, %v362
        %v389 = vpop.permute.xlu0 %388
        %392 = vset.pattern.permute.xlu0 0
        %393 = vperm.xlu0 %392, %v363
        %v394 = vpop.permute.xlu0 %393
        %397 = vset.pattern.permute.xlu0 0
        %398 = vperm.xlu0 %397, %v364
        %v399 = vpop.permute.xlu0 %398
        %402 = vset.pattern.permute.xlu0 0
        %403 = vperm.xlu0 %402, %v365
        %v404 = vpop.permute.xlu0 %403
        %407 = vset.pattern.permute.xlu0 0
        %408 = vperm.xlu0 %407, %v366
        %v409 = vpop.permute.xlu0 %408
        %412 = vset.pattern.permute.xlu0 0
        %413 = vperm.xlu0 %412, %v367
        %v414 = vpop.permute.xlu0 %413
        %417 = vset.pattern.permute.xlu0 0
        %418 = vperm.xlu0 %417, %v368
        %v419 = vpop.permute.xlu0 %418
        %422 = vset.pattern.permute.xlu0 0
        %423 = vperm.xlu0 %422, %v369
        %v424 = vpop.permute.xlu0 %423
        %427 = vset.pattern.permute.xlu0 0
        %428 = vperm.xlu0 %427, %v370
        %v429 = vpop.permute.xlu0 %428
        %432 = vset.pattern.permute.xlu0 0
        %433 = vperm.xlu0 %432, %v371
        %v434 = vpop.permute.xlu0 %433
        %437 = vset.pattern.permute.xlu0 0
        %438 = vperm.xlu0 %437, %v372
        %v439 = vpop.permute.xlu0 %438
        %442 = vset.pattern.permute.xlu0 0
        %443 = vperm.xlu0 %442, %v373
        %v444 = vpop.permute.xlu0 %443
        %447 = vset.pattern.permute.xlu0 0
        %448 = vperm.xlu0 %447, %v374
        %v449 = vpop.permute.xlu0 %448
        %452 = vset.pattern.permute.xlu0 0
        %453 = vperm.xlu0 %452, %v375
        %v454 = vpop.permute.xlu0 %453
        %vm456 = vcmask 64512
        %v458 = vsel %vm456, %v344, 0
        %v461 = vsel %vm456, %v345, 0
        %v464 = vsel %vm456, %v346, 0
        %v467 = vsel %vm456, %v347, 0
        %v470 = vsel %vm456, %v348, 0
        %v473 = vsel %vm456, %v349, 0
        %v476 = vsel %vm456, %v350, 0
        %v479 = vsel %vm456, %v351, 0
        %v482 = vsel %vm456, %v352, 0
        %v485 = vsel %vm456, %v353, 0
        %v488 = vsel %vm456, %v354, 0
        %v491 = vsel %vm456, %v355, 0
        %v494 = vsel %vm456, %v356, 0
        %v497 = vsel %vm456, %v357, 0
        %v500 = vsel %vm456, %v358, 0
        %v503 = vsel %vm456, %v359, 0
        %505 = vmatpush.msra.mxu0 0.0
        %506 = vmatpush.msra.mxu0 0.0
        %507 = vmatpush.msra.mxu0 0.0
        %508 = vmatpush.msra.mxu0 0.0
        %509 = vmatpush.msra.mxu0 0.0
        %510 = vmatpush.msra.mxu0 0.0
        %511 = vmatpush.msra.mxu0 0.0
        %512 = vmatpush.msra.mxu0 0.0
        %513 = vmatpush.msra.mxu0 0.0
        %514 = vmatpush.msra.mxu0 0.0
        %515 = vmatpush.msra.mxu0 0.0
        %516 = vmatpush.msra.mxu0 0.0
        %517 = vmatpush.msra.mxu0 0.0
        %518 = vmatpush.msra.mxu0 0.0
        %519 = vmatpush.msra.mxu0 0.0
        %520 = vmatpush.msra.mxu0 %v343
        %521 = vmatmul.f32.gmra.mxu0 %v458
        %v522 = vpop.f32.mrf.mxu0
        %v523 = vadd.f32 %v379, %v522
        %524 = vmatmul.f32.gmra.mxu0 %v461
        %v525 = vpop.f32.mrf.mxu0
        %v526 = vadd.f32 %v384, %v525
        %527 = vmatmul.f32.gmra.mxu0 %v464
        %v528 = vpop.f32.mrf.mxu0
        %v529 = vadd.f32 %v389, %v528
        %530 = vmatmul.f32.gmra.mxu0 %v467
        %v531 = vpop.f32.mrf.mxu0
        %v532 = vadd.f32 %v394, %v531
        %533 = vmatmul.f32.gmra.mxu0 %v470
        %v534 = vpop.f32.mrf.mxu0
        %v535 = vadd.f32 %v399, %v534
        %536 = vmatmul.f32.gmra.mxu0 %v473
        %v537 = vpop.f32.mrf.mxu0
        %v538 = vadd.f32 %v404, %v537
        %539 = vmatmul.f32.gmra.mxu0 %v476
        %v540 = vpop.f32.mrf.mxu0
        %v541 = vadd.f32 %v409, %v540
        %542 = vmatmul.f32.gmra.mxu0 %v479
        %v543 = vpop.f32.mrf.mxu0
        %v544 = vadd.f32 %v414, %v543
        %545 = vmatmul.f32.gmra.mxu0 %v482
        %v546 = vpop.f32.mrf.mxu0
        %v547 = vadd.f32 %v419, %v546
        %548 = vmatmul.f32.gmra.mxu0 %v485
        %v549 = vpop.f32.mrf.mxu0
        %v550 = vadd.f32 %v424, %v549
        %551 = vmatmul.f32.gmra.mxu0 %v488
        %v552 = vpop.f32.mrf.mxu0
        %v553 = vadd.f32 %v429, %v552
        %554 = vmatmul.f32.gmra.mxu0 %v491
        %v555 = vpop.f32.mrf.mxu0
        %v556 = vadd.f32 %v434, %v555
        %557 = vmatmul.f32.gmra.mxu0 %v494
        %v558 = vpop.f32.mrf.mxu0
        %v559 = vadd.f32 %v439, %v558
        %560 = vmatmul.f32.gmra.mxu0 %v497
        %v561 = vpop.f32.mrf.mxu0
        %v562 = vadd.f32 %v444, %v561
        %563 = vmatmul.f32.gmra.mxu0 %v500
        %v564 = vpop.f32.mrf.mxu0
        %v565 = vadd.f32 %v449, %v564
        %566 = vmatmul.f32.gmra.mxu0 %v503
        %v567 = vpop.f32.mrf.mxu0
        %v568 = vadd.f32 %v454, %v567
        %569 = vdwg.mxu0
        %v570 = vmax.f32 %v523, 0.0
        %v571 = vmax.f32 %v526, 0.0
        %v572 = vmax.f32 %v529, 0.0
        %v573 = vmax.f32 %v532, 0.0
        %v574 = vmax.f32 %v535, 0.0
        %v575 = vmax.f32 %v538, 0.0
        %v576 = vmax.f32 %v541, 0.0
        %v577 = vmax.f32 %v544, 0.0
        %v578 = vmax.f32 %v547, 0.0
        %v579 = vmax.f32 %v550, 0.0
        %v580 = vmax.f32 %v553, 0.0
        %v581 = vmax.f32 %v556, 0.0
        %v582 = vmax.f32 %v559, 0.0
        %v583 = vmax.f32 %v562, 0.0
        %v584 = vmax.f32 %v565, 0.0
        %v585 = vmax.f32 %v568, 0.0
        %v586 = vld [vmem:[#allocation2] sm:$0xff]
        %587 = vmatpush.msra.mxu0 %v585
        %588 = vmatpush.msra.mxu0 %v584
        %589 = vmatpush.msra.mxu0 %v583
        %590 = vmatpush.msra.mxu0 %v582
        %591 = vmatpush.msra.mxu0 %v581
        %592 = vmatpush.msra.mxu0 %v580
        %593 = vmatpush.msra.mxu0 %v579
        %594 = vmatpush.msra.mxu0 %v578
        %595 = vmatpush.msra.mxu0 %v577
        %596 = vmatpush.msra.mxu0 %v576
        %597 = vmatpush.msra.mxu0 %v575
        %598 = vmatpush.msra.mxu0 %v574
        %599 = vmatpush.msra.mxu0 %v573
        %600 = vmatpush.msra.mxu0 %v572
        %601 = vmatpush.msra.mxu0 %v571
        %602 = vmatpush.msra.mxu0 %v570
        %603 = vmatmul.f32.gmra.mxu0 %v586
        %v604 = vpop.f32.mrf.mxu0
        %v605 = vadd.f32 0.0, %v604
        %606 = vdwg.mxu0
        %v607 = vadd.f32 %v343, %v605
        %v608 = vld [vmem:[%s4] sm:$0xff]
        %610 = vset.pattern.permute.xlu0 0
        %611 = vperm.xlu0 %610, %v608
        %v612 = vpop.permute.xlu0 %611
        %v614 = vadd.f32 %v607, %v612
        %v615 = vld [vmem:[%s5] sm:$0xff]
        %v616 = vld [vmem:[%s5 + $0x8] sm:$0xff]
        %v617 = vld [vmem:[%s5 + $0x10] sm:$0xff]
        %v618 = vld [vmem:[%s5 + $0x18] sm:$0xff]
        %v619 = vld [vmem:[%s5 + $0x20] sm:$0xff]
        %v620 = vld [vmem:[%s5 + $0x28] sm:$0xff]
        %v621 = vld [vmem:[%s5 + $0x30] sm:$0xff]
        %v622 = vld [vmem:[%s5 + $0x38] sm:$0xff]
        %v623 = vld [vmem:[%s5 + $0x40] sm:$0xff]
        %v624 = vld [vmem:[%s5 + $0x48] sm:$0xff]
        %v625 = vld [vmem:[%s5 + $0x50] sm:$0xff]
        %v626 = vld [vmem:[%s5 + $0x58] sm:$0xff]
        %v627 = vld [vmem:[%s5 + $0x60] sm:$0xff]
        %v628 = vld [vmem:[%s5 + $0x68] sm:$0xff]
        %v629 = vld [vmem:[%s5 + $0x70] sm:$0xff]
        %v630 = vld [vmem:[%s5 + $0x78] sm:$0xff]
        %v631 = vld [vmem:[%s6] sm:$0x1]
        %v633 = vperm.slane %v631, 0
        %635 = vmatpush.msra.mxu0 %v630
        %636 = vmatpush.msra.mxu0 %v629
        %637 = vmatpush.msra.mxu0 %v628
        %638 = vmatpush.msra.mxu0 %v627
        %639 = vmatpush.msra.mxu0 %v626
        %640 = vmatpush.msra.mxu0 %v625
        %641 = vmatpush.msra.mxu0 %v624
        %642 = vmatpush.msra.mxu0 %v623
        %643 = vmatpush.msra.mxu0 %v622
        %644 = vmatpush.msra.mxu0 %v621
        %645 = vmatpush.msra.mxu0 %v620
        %646 = vmatpush.msra.mxu0 %v619
        %647 = vmatpush.msra.mxu0 %v618
        %648 = vmatpush.msra.mxu0 %v617
        %649 = vmatpush.msra.mxu0 %v616
        %650 = vmatpush.msra.mxu0 %v615
        %651 = vmatmul.f32.gmra.mxu0 %v614
        %v652 = vpop.f32.mrf.mxu0
        %v653 = vadd.f32 %v633, %v652
        %654 = vdwg.mxu0
        %v655 = vmax.f32 %v653, 0.0
        %v656 = vld [vmem:[%s7] sm:$0xff]
        %v657 = vld [vmem:[%s7 + $0x8] sm:$0xff]
        %v658 = vld [vmem:[%s7 + $0x10] sm:$0xff]
        %v659 = vld [vmem:[%s7 + $0x18] sm:$0xff]
        %v660 = vld [vmem:[%s7 + $0x20] sm:$0xff]
        %v661 = vld [vmem:[%s7 + $0x28] sm:$0xff]
        %v662 = vld [vmem:[%s7 + $0x30] sm:$0xff]
        %v663 = vld [vmem:[%s7 + $0x38] sm:$0xff]
        %v664 = vld [vmem:[%s7 + $0x40] sm:$0xff]
        %v665 = vld [vmem:[%s7 + $0x48] sm:$0xff]
        %v666 = vld [vmem:[%s7 + $0x50] sm:$0xff]
        %v667 = vld [vmem:[%s7 + $0x58] sm:$0xff]
        %v668 = vld [vmem:[%s7 + $0x60] sm:$0xff]
        %v669 = vld [vmem:[%s7 + $0x68] sm:$0xff]
        %v670 = vld [vmem:[%s7 + $0x70] sm:$0xff]
        %v671 = vld [vmem:[%s7 + $0x78] sm:$0xff]
        %672 = vmatpush.msra.mxu0 %v671
        %673 = vmatpush.msra.mxu0 %v670
        %674 = vmatpush.msra.mxu0 %v669
        %675 = vmatpush.msra.mxu0 %v668
        %676 = vmatpush.msra.mxu0 %v667
        %677 = vmatpush.msra.mxu0 %v666
        %678 = vmatpush.msra.mxu0 %v665
        %679 = vmatpush.msra.mxu0 %v664
        %680 = vmatpush.msra.mxu0 %v663
        %681 = vmatpush.msra.mxu0 %v662
        %682 = vmatpush.msra.mxu0 %v661
        %683 = vmatpush.msra.mxu0 %v660
        %684 = vmatpush.msra.mxu0 %v659
        %685 = vmatpush.msra.mxu0 %v658
        %686 = vmatpush.msra.mxu0 %v657
        %687 = vmatpush.msra.mxu0 %v656
        %688 = vmatmul.f32.gmra.mxu0 %v655
        %v689 = vpop.f32.mrf.mxu0
        %v690 = vadd.f32 0.0, %v689
        %691 = vdwg.mxu0
        %v692 = vadd.f32 %v614, %v690
        %v693 = vld [vmem:[%s8] sm:$0x1]
        %v695 = vperm.slane %v693, 0
        %v697 = vadd.f32 %v692, %v695
        %698 = vst [vmem:[%s338] sm:$0xff] %v697
        %s699 = sand.u32 %s226, 1
        %s700 = scalar_lea.sflag [#allocation4], %s699
        %s701 = sand.u32 %s226, 1
        %s702 = smul.addr %s701, 8
        %s703 = scalar_lea.vmem [#allocation5], %s702
        // Predicated region
        $region61: #{tpu_custom_call.1} parent=55 // pred_check
          %p704 = pneg %p236
        $region62: #{tpu_custom_call.1} parent=55 // pred_check_branch
          %706 = sbr.rel (%p704) target = $region64
        $region63: #{tpu_custom_call.1} parent=55 // pred_region
          %708 = vsyncadd %s700, 0
          %s709 = smul.addr %s24, 8
          %s710 = scalar_lea.hbm %s9, %s709
          %s712 = sshll.u32 %s703, 4
          %s713 = int_to_ptr.vmem [resolvable:$true] %s712
          %s714 = sshll.u32 %s710, 4
          %s715 = int_to_ptr.hbm [resolvable:$true] %s714
          %717 = dma.vmem_to_hbm [thread:$0]  %s713, 128, %s715, %s700
        $region64: #{tpu_custom_call.1} parent=55 // pred_fallthru
          _
      $region56: #{tpu_custom_call.1} parent=5 // pred_fallthru
        _
      %p718 = scmp.le.s32.totalorder 2, %s19
      // Predicated region
      $region65: #{tpu_custom_call.1} parent=5 // pred_check
        %p719 = pneg %p718
      $region66: #{tpu_custom_call.1} parent=5 // pred_check_branch
        %721 = sbr.rel (%p719) target = $region68
      $region67: #{tpu_custom_call.1} parent=5 // pred_region
        %s722 = ssub.s32 %s19, 2
        // Predicated region
        $region69: #{tpu_custom_call.1} parent=67 // pred_check
          %p723 = pneg %p242
        $region70: #{tpu_custom_call.1} parent=67 // pred_check_branch
          %725 = sbr.rel (%p723) target = $region72
        $region71: #{tpu_custom_call.1} parent=67 // pred_region
          %s726 = sand.u32 %s227, 1
          %s727 = scalar_lea.sflag [#allocation4], %s726
          %s728 = sand.u32 %s227, 1
          %s729 = smul.addr %s728, 8
          %s730 = scalar_lea.vmem [#allocation5], %s729
          %732 = dma.done %s727, 128
        $region72: #{tpu_custom_call.1} parent=67 // pred_fallthru
          _
      $region68: #{tpu_custom_call.1} parent=5 // pred_fallthru
        _
    $region6: #{tpu_custom_call.1} parent=1 // loop_footer
      %s23 = sadd.s32 1, %s19
    $region7: #{tpu_custom_call.1} parent=1 // loop_footer_branch
      %18 = sbr.rel target = $region3
    $region8: #{tpu_custom_call.1} parent=1 // loop_exit
      _
    %733 = vsyncpa [#allocation3], 1
    %s734 = scalar_lea.sflag [#allocation3], 1
    %735 = vsyncpa %s734, 1
    %736 = vsyncpa [#allocation4], 1
    %s737 = scalar_lea.sflag [#allocation4], 1
    %738 = vsyncpa %s737, 1

</llo_original>
